<compile_context>
chip_gen: v7x
topology: tpu7x:2x2x1
jax: 0.10.0
libtpu: 0.0.40
codegen_flags: <defaults>
</compile_context>

<pallas_src>
import math

import jax
import jax.numpy as jnp
from jax.experimental import pallas as pl
from jax.experimental.pallas import tpu as pltpu


def _cdiv(a, b):
    return -(-a // b)


def _round_up(x, m):
    return _cdiv(x, m) * m


def _sublane_multiple(dtype):
    # Native sublane packing: 8 rows for 4-byte, 16 for 2-byte, 32 for 1-byte dtypes.
    return max(8, 32 // jnp.dtype(dtype).itemsize)


def _default_vmem_limit_bytes():
    """~62% of this generation's physical VMEM (v5e/v6e 128 MiB, v7x 64 MiB/TC)."""
    cap = 64 * 1024 * 1024  # conservative fallback (v7x per-TC size)
    try:
        cap = int(getattr(pltpu.get_tpu_info(), "vmem_capacity_bytes", cap))
    except Exception:
        pass
    return int(cap * 5 // 8)


def _x_block_budget(vmem_limit_bytes, num_omics):
    # Double-buffered inputs + double-buffered outputs must fit:
    #   2*x_block + 2*out_block (= x_block/num_omics each) + tiny weights/bias.
    usable = int(vmem_limit_bytes * 0.8)  # headroom for weights/bias + compiler scratch
    return max(2 * 1024 * 1024, usable * num_omics // (2 * (num_omics + 1)))


def _choose_tiles(num_omics, batch, size_in, dtype, x_block_budget, tb, tn):
    """Lane-dense tiles sized for the HBM roofline (no padding of x required)."""
    itemsize = jnp.dtype(dtype).itemsize
    sub = _sublane_multiple(dtype)

    # Lane (size_in) tile: prefer the whole row -> fully contiguous HBM slabs.
    if tn is None:
        min_row_bytes = num_omics * sub * size_in * itemsize
        if size_in <= 128 or min_row_bytes <= x_block_budget:
            tn = size_in
        else:
            tn = max(128, (x_block_budget // (num_omics * sub * itemsize)) // 128 * 128)
    if tn >= size_in:
        tn = size_in  # full-extent block: always legal, contiguous, no masking waste

    # Batch (sublane) tile: fill the budget, rounded to the native packing multiple.
    if tb is None:
        max_rows = x_block_budget // (num_omics * tn * itemsize)
        tb = max(sub, (max_rows // sub) * sub)
        # Keep >=2 batch tiles when batch permits so v7x's two TCs both get work.
        if batch >= 2 * sub:
            tb = min(tb, _round_up(_cdiv(batch, 2), sub))
    if tb >= batch:
        tb = batch  # full-extent block: always legal even for unaligned batch
    return tb, tn


def _make_omic_kernel(num_omics):
    def omic_linear_kernel(x_ref, w_ref, b_ref, o_ref):
        # x_ref: (num_omics, tb, tn)  VMEM
        # w_ref: (num_omics, tn)      VMEM (resident across the inner batch loop)
        # b_ref: (1, tn)              VMEM (resident across the inner batch loop)
        # o_ref: (tb, tn)             VMEM (lane-dense output tile)
        w = w_ref[...].astype(jnp.float32)
        # Unrolled VPU reduction over the tiny omics axis, accumulated in f32
        # (exact vs. an f32 reference even for bf16 inputs), cast once at the store.
        acc = x_ref[0].astype(jnp.float32) * w[0:1, :]
        for o in range(1, num_omics):
            acc = acc + x_ref[o].astype(jnp.float32) * w[o:o + 1, :]
        o_ref[...] = (acc + b_ref[...].astype(jnp.float32)).astype(o_ref.dtype)

    return omic_linear_kernel


def omic_linear_forward_omics_major(x_om, weights, bias, *, tb=None, tn=None,
                                    vmem_limit_bytes=None):
    """Preferred entry point.

    x_om:    (num_omics, batch, size_in)   -- omics-major layout (no transpose needed)
    weights: (num_omics, size_in)
    bias:    (size_in,)
    returns: (batch, size_in)
    """
    num_omics, batch, size_in = x_om.shape
    itemsize = jnp.dtype(x_om.dtype).itemsize

    if vmem_limit_bytes is None:
        vmem_limit_bytes = _default_vmem_limit_bytes()
    budget = _x_block_budget(vmem_limit_bytes, num_omics)
    tb, tn = _choose_tiles(num_omics, batch, size_in, x_om.dtype, budget, tb, tn)

    # No jnp.pad of x / weights / bias: unaligned edges are handled by full-extent
    # blocks or boundary blocks (OOB reads only feed OOB outputs; OOB writes dropped).
    bias2d = bias.reshape(1, size_in)
    grid = (_cdiv(size_in, tn), _cdiv(batch, tb))  # batch innermost -> W/bias resident

    cost = pl.CostEstimate(
        flops=2 * num_omics * batch * size_in,
        bytes_accessed=itemsize * (num_omics * batch * size_in + batch * size_in
                                   + num_omics * size_in + size_in),
        transcendentals=0,
    )

    return pl.pallas_call(
        _make_omic_kernel(num_omics),
        out_shape=jax.ShapeDtypeStruct((batch, size_in), x_om.dtype),
        grid_spec=pltpu.PrefetchScalarGridSpec(
            num_scalar_prefetch=0,
            grid=grid,
            in_specs=[
                pl.BlockSpec((num_omics, tb, tn), lambda si, bi: (0, bi, si)),
                pl.BlockSpec((num_omics, tn), lambda si, bi: (0, si)),   # const over bi
                pl.BlockSpec((1, tn), lambda si, bi: (0, si)),           # const over bi
            ],
            out_specs=pl.BlockSpec((tb, tn), lambda si, bi: (bi, si)),
        ),
        compiler_params=pltpu.CompilerParams(
            dimension_semantics=("parallel", "parallel"),
            vmem_limit_bytes=int(vmem_limit_bytes),
        ),
        cost_estimate=cost,
    )(x_om, weights, bias2d)


def omic_linear_forward(x, weights, bias, **kwargs):
    """PyTorch-layout adapter: x is (batch, size_in, num_omics).

    NOTE: the transpose below costs one extra HBM round trip for x.  In a real
    pipeline, produce x in the omics-major layout (num_omics, batch, size_in) and call
    `omic_linear_forward_omics_major` directly (or let XLA fuse this transpose into
    the producer of x).
    """
    x_om = jnp.transpose(x, (2, 0, 1))
    return omic_linear_forward_omics_major(x_om, weights, bias, **kwargs)


def init_params(key, size_in, num_omics, dtype=jnp.float32):
    """Deterministic init mirroring the PyTorch module's __init__ distributions."""
    kw, kb = jax.random.split(key)
    fan_in = size_in  # fan_in of a (num_omics, size_in) 2-D parameter
    gain = math.sqrt(2.0 / (1.0 + 5.0))  # kaiming_uniform_(a=sqrt(5))
    w_bound = gain * math.sqrt(3.0 / fan_in)
    weights = jax.random.uniform(
        kw, (num_omics, size_in), dtype=dtype, minval=-w_bound, maxval=w_bound)
    b_bound = 1.0 / math.sqrt(fan_in)
    bias = jax.random.uniform(
        kb, (size_in,), dtype=dtype, minval=-b_bound, maxval=b_bound)
    return weights, bias


def _reference(x_pt, weights, bias):
    # Pure-JAX transcription of the PyTorch forward: (x * W.T).sum(dim=2) + bias
    return jnp.sum(x_pt * weights.T[None, :, :], axis=2) + bias


if __name__ == "__main__":
    key = jax.random.PRNGKey(0)
    k1, k2, k3, k4, k5, k6 = jax.random.split(key, 6)

    # --- Case 1: aligned shapes, omics-major input (zero-transpose hot path). ------
    num_omics, batch, size_in = 4, 8, 256
    x_om = jax.random.normal(k1, (num_omics, batch, size_in), dtype=jnp.float32)
    weights, bias = init_params(k2, size_in, num_omics)

    out1 = jax.block_until_ready(omic_linear_forward_omics_major(x_om, weights, bias))
    x_pt = jnp.transpose(x_om, (1, 2, 0))            # only for the reference check
    ref1 = _reference(x_pt, weights, bias)
    assert out1.shape == (batch, size_in), out1.shape
    assert jnp.allclose(out1, ref1, atol=1e-5, rtol=1e-5), "case 1 mismatch"

    # --- Case 2: PyTorch-layout adapter path (documented extra transpose). ---------
    out2 = jax.block_until_ready(omic_linear_forward(x_pt, weights, bias))
    assert jnp.allclose(out2, ref1, atol=1e-5, rtol=1e-5), "case 2 mismatch"

    # --- Case 3: unaligned small shapes -> full-extent blocks, no pad copies. ------
    num_omics3, batch3, size_in3 = 5, 3, 40
    x_om3 = jax.random.normal(k3, (num_omics3, batch3, size_in3), dtype=jnp.float32)
    w3, b3 = init_params(k4, size_in3, num_omics3)
    out3 = jax.block_until_ready(omic_linear_forward_omics_major(x_om3, w3, b3))
    ref3 = _reference(jnp.transpose(x_om3, (1, 2, 0)), w3, b3)
    assert out3.shape == (batch3, size_in3), out3.shape
    assert jnp.allclose(out3, ref3, atol=1e-5, rtol=1e-5), "case 3 mismatch"

    # --- Case 4: forced small tiles -> real (3, 3) grid with masked boundary blocks
    #     (exercises the no-pad ragged-edge path on both tiled axes). --------------
    num_omics4, batch4, size_in4 = 3, 20, 300
    x_om4 = jax.random.normal(k5, (num_omics4, batch4, size_in4), dtype=jnp.float32)
    w4, b4 = init_params(k6, size_in4, num_omics4)
    out4 = jax.block_until_ready(
        omic_linear_forward_omics_major(x_om4, w4, b4, tb=8, tn=128))
    ref4 = _reference(jnp.transpose(x_om4, (1, 2, 0)), w4, b4)
    assert out4.shape == (batch4, size_in4), out4.shape
    assert jnp.allclose(out4, ref4, atol=1e-5, rtol=1e-5), "case 4 mismatch"

    print("KERNEL_OK")
</pallas_src>

<mosaic_0001>
module attributes {stable_mosaic.version = 11 : i64} {
  func.func @omic_linear_kernel(%arg0: i32, %arg1: i32, %arg2: memref<4x8x256xf32, #tpu.memory_space<vmem>>, %arg3: memref<4x256xf32, #tpu.memory_space<vmem>>, %arg4: memref<1x256xf32, #tpu.memory_space<vmem>>, %arg5: memref<8x256xf32, #tpu.memory_space<vmem>>) attributes {dimension_semantics = [#tpu.dimension_semantics<parallel>, #tpu.dimension_semantics<parallel>], iteration_bounds = array<i64: 1, 1>, scalar_prefetch = 0 : i64, scratch_operands = 0 : i64, tpu.core_type = #tpu.core_type<tc>, window_params = [{transform_indices = @transform_0, window_bounds = array<i64: 4, 8, 256>}, {transform_indices = @transform_1, window_bounds = array<i64: 4, 256>}, {transform_indices = @transform_2, window_bounds = array<i64: 1, 256>}, {transform_indices = @transform_3, window_bounds = array<i64: 8, 256>}]} {
    %c0 = arith.constant 0 : index
    %c0_0 = arith.constant 0 : index
    %0 = vector.load %arg3[%c0, %c0_0] : memref<4x256xf32, #tpu.memory_space<vmem>>, vector<4x256xf32>
    %c0_1 = arith.constant 0 : index
    %c0_2 = arith.constant 0 : index
    %c0_3 = arith.constant 0 : index
    %1 = vector.load %arg2[%c0_1, %c0_2, %c0_3] : memref<4x8x256xf32, #tpu.memory_space<vmem>>, vector<1x8x256xf32>
    %2 = vector.shape_cast %1 : vector<1x8x256xf32> to vector<8x256xf32>
    %3 = vector.extract_strided_slice %0 {offsets = [0, 0], sizes = [1, 256], strides = [1, 1]} : vector<4x256xf32> to vector<1x256xf32>
    %4 = vector.broadcast %3 : vector<1x256xf32> to vector<8x256xf32>
    %5 = arith.mulf %2, %4 : vector<8x256xf32>
    %c1 = arith.constant 1 : index
    %c0_4 = arith.constant 0 : index
    %c0_5 = arith.constant 0 : index
    %6 = vector.load %arg2[%c1, %c0_4, %c0_5] : memref<4x8x256xf32, #tpu.memory_space<vmem>>, vector<1x8x256xf32>
    %7 = vector.shape_cast %6 : vector<1x8x256xf32> to vector<8x256xf32>
    %8 = vector.extract_strided_slice %0 {offsets = [1, 0], sizes = [1, 256], strides = [1, 1]} : vector<4x256xf32> to vector<1x256xf32>
    %9 = vector.broadcast %8 : vector<1x256xf32> to vector<8x256xf32>
    %10 = arith.mulf %7, %9 : vector<8x256xf32>
    %11 = arith.addf %5, %10 : vector<8x256xf32>
    %c2 = arith.constant 2 : index
    %c0_6 = arith.constant 0 : index
    %c0_7 = arith.constant 0 : index
    %12 = vector.load %arg2[%c2, %c0_6, %c0_7] : memref<4x8x256xf32, #tpu.memory_space<vmem>>, vector<1x8x256xf32>
    %13 = vector.shape_cast %12 : vector<1x8x256xf32> to vector<8x256xf32>
    %14 = vector.extract_strided_slice %0 {offsets = [2, 0], sizes = [1, 256], strides = [1, 1]} : vector<4x256xf32> to vector<1x256xf32>
    %15 = vector.broadcast %14 : vector<1x256xf32> to vector<8x256xf32>
    %16 = arith.mulf %13, %15 : vector<8x256xf32>
    %17 = arith.addf %11, %16 : vector<8x256xf32>
    %c3 = arith.constant 3 : index
    %c0_8 = arith.constant 0 : index
    %c0_9 = arith.constant 0 : index
    %18 = vector.load %arg2[%c3, %c0_8, %c0_9] : memref<4x8x256xf32, #tpu.memory_space<vmem>>, vector<1x8x256xf32>
    %19 = vector.shape_cast %18 : vector<1x8x256xf32> to vector<8x256xf32>
    %20 = vector.extract_strided_slice %0 {offsets = [3, 0], sizes = [1, 256], strides = [1, 1]} : vector<4x256xf32> to vector<1x256xf32>
    %21 = vector.broadcast %20 : vector<1x256xf32> to vector<8x256xf32>
    %22 = arith.mulf %19, %21 : vector<8x256xf32>
    %23 = arith.addf %17, %22 : vector<8x256xf32>
    %c0_10 = arith.constant 0 : index
    %c0_11 = arith.constant 0 : index
    %24 = vector.load %arg4[%c0_10, %c0_11] : memref<1x256xf32, #tpu.memory_space<vmem>>, vector<1x256xf32>
    %25 = vector.broadcast %24 : vector<1x256xf32> to vector<8x256xf32>
    %26 = arith.addf %23, %25 : vector<8x256xf32>
    %c0_12 = arith.constant 0 : index
    %c0_13 = arith.constant 0 : index
    %27 = vector.load %arg5[%c0_12, %c0_13] : memref<8x256xf32, #tpu.memory_space<vmem>>, vector<8x256xf32>
    tpu.vector_store %arg5[%c0_12, %c0_13], %26 {strides = array<i32>} : memref<8x256xf32, #tpu.memory_space<vmem>>, vector<8x256xf32>,
    return
  }
  func.func @transform_0(%arg0: i32, %arg1: i32) -> (i32, i32, i32) {
    %c0_i32 = arith.constant 0 : i32
    %c0_i32_0 = arith.constant 0 : i32
    return %c0_i32, %arg1, %arg0 : i32, i32, i32
  }
  func.func @transform_1(%arg0: i32, %arg1: i32) -> (i32, i32) {
    %c0_i32 = arith.constant 0 : i32
    %c0_i32_0 = arith.constant 0 : i32
    return %c0_i32, %arg0 : i32, i32
  }
  func.func @transform_2(%arg0: i32, %arg1: i32) -> (i32, i32) {
    %c0_i32 = arith.constant 0 : i32
    %c0_i32_0 = arith.constant 0 : i32
    return %c0_i32, %arg0 : i32, i32
  }
  func.func @transform_3(%arg0: i32, %arg1: i32) -> (i32, i32) {
    %c0_i32 = arith.constant 0 : i32
    return %arg1, %arg0 : i32, i32
  }
}

</mosaic_0001>

<llo_original>
// kernel: tpu_custom_call.1
$region0: #{tpu_custom_call.1}
  #allocation0 [shape = 'u32[]', space=smem, size = 0x4, offset = 0x4, fixed_abs, tag = 'smem constant byte address 0x4 - core index']
  #allocation1 [shape = 'u32[144,128]{1,0:T(1,128)}', space=vmem, size = 0x12000, scoped, tag = 'internal scratch']
  %s0 = inlined_call_operand.hbm [shape: f32[4,8,256], index: 0, kind: input, shape index: {}]
  %s1 = inlined_call_operand.hbm [shape: f32[4,256], index: 1, kind: input, shape index: {}]
  %s2 = inlined_call_operand.vmem [shape: f32[1,256], index: 2, kind: input, shape index: {}]
  %s3 = inlined_call_operand.hbm [shape: f32[8,256], index: 3, kind: output, shape index: {}]
  %s4 = sld [smem:[#allocation0]]
  $region30: #{tpu_custom_call.1} parent=0
    _
  %s6 = ssub.s32 1, %s4
  %s7 = scalar_select 0, %s6, %s4
  $region1: #{tpu_custom_call.1} parent=0
    #allocation2 [shape = 'u8[32768]{0}', space=vmem, size = 0x8000, scoped, tag = 'input window, operand 0, single buffered']
    #allocation3 [shape = 's32[1]{0}', space=sflag, size = 0x4, scoped, tag = 'scoped memory for tpu_custom_call.1']
    #allocation4 [shape = 's32[1]{0}', space=sflag, size = 0x4, scoped, tag = 'scoped memory for tpu_custom_call.1']
    #allocation5 [shape = 'u8[4096]{0}', space=vmem, size = 0x1000, scoped, tag = 'input window, operand 1, single buffered']
    #allocation6 [shape = 's32[1]{0}', space=sflag, size = 0x4, scoped, tag = 'scoped memory for tpu_custom_call.1']
    #allocation7 [shape = 'u8[8192]{0}', space=vmem, size = 0x2000, scoped, tag = 'output window, operand 0, single buffered']
    %8 = vsyncpa [#allocation3], 0
    %9 = vsyncpa [#allocation6], 0
    %10 = vsyncpa [#allocation4], 0
    // Predicated region
    $region2: #{tpu_custom_call.1} parent=1 // pred_check
      _
    $region3: #{tpu_custom_call.1} parent=1 // pred_check_branch
      %12 = sbr.rel (0) target = $region5
    $region4: #{tpu_custom_call.1} parent=1 // pred_region
      %s14 = ssub.s32 1024, 1024
      %15 = vsyncadd [#allocation3], %s14
      %s16 = sshll.u32 [#allocation2], 4
      %s17 = int_to_ptr.vmem [resolvable:$true] %s16
      %22 = dma.hbm_to_vmem [thread:$0]  %s0, 1024, %s17, [#allocation3], 256, 256, 16
    $region5: #{tpu_custom_call.1} parent=1 // pred_fallthru
      _
    // Predicated region
    $region6: #{tpu_custom_call.1} parent=1 // pred_check
      _
    $region7: #{tpu_custom_call.1} parent=1 // pred_check_branch
      %24 = sbr.rel (0) target = $region9
    $region8: #{tpu_custom_call.1} parent=1 // pred_region
      %s26 = ssub.s32 128, 128
      %27 = vsyncadd [#allocation6], %s26
      %s29 = sshll.u32 [#allocation5], 4
      %s30 = int_to_ptr.vmem [resolvable:$true] %s29
      %32 = dma.hbm_to_vmem [thread:$0]  %s1, 128, %s30, [#allocation6]
    $region9: #{tpu_custom_call.1} parent=1 // pred_fallthru
      _
    // Predicated region
    $region10: #{tpu_custom_call.1} parent=1 // pred_check
      _
    $region11: #{tpu_custom_call.1} parent=1 // pred_check_branch
      %34 = sbr.rel (0) target = $region13
    $region12: #{tpu_custom_call.1} parent=1 // pred_region
      _
    $region13: #{tpu_custom_call.1} parent=1 // pred_fallthru
      _
    // Predicated region
    $region14: #{tpu_custom_call.1} parent=1 // pred_check
      _
    $region15: #{tpu_custom_call.1} parent=1 // pred_check_branch
      %36 = sbr.rel (0) target = $region17
    $region16: #{tpu_custom_call.1} parent=1 // pred_region
      %37 = dma.done [#allocation3], 1024
    $region17: #{tpu_custom_call.1} parent=1 // pred_fallthru
      _
    // Predicated region
    $region18: #{tpu_custom_call.1} parent=1 // pred_check
      _
    $region19: #{tpu_custom_call.1} parent=1 // pred_check_branch
      %39 = sbr.rel (0) target = $region21
    $region20: #{tpu_custom_call.1} parent=1 // pred_region
      %40 = dma.done [#allocation6], 128
    $region21: #{tpu_custom_call.1} parent=1 // pred_fallthru
      _
    %v41 = vld [vmem:[#allocation5] sm:$0xff]
    %v42 = vld [vmem:[#allocation2] sm:$0xff]
    %v43 = vld [vmem:[#allocation2 + $0x8] sm:$0xff]
    %v45 = vlaneseq
    %v46 = vshrl.u32 %v45, 7
    %v47 = vsub.s32 0, %v46
    %v48 = vrot.slane %v41, %v47
    %v49 = vlaneseq
    %v50 = vshrl.u32 %v49, 7
    %v51 = vsub.s32 4, %v50
    %v52 = vrot.slane %v41, %v51
    %v55 = vlaneseq
    %v56 = vshrl.u32 %v55, 7
    %v57 = vsub.s32 0, %v56
    %v58 = vrot.slane %v48, %v57
    %v59 = vlaneseq
    %v60 = vshrl.u32 %v59, 7
    %v61 = vsub.s32 0, %v60
    %v62 = vrot.slane %v52, %v61
    %v63 = vmul.f32 %v42, %v58
    %v64 = vmul.f32 %v43, %v62
    %s65 = scalar_lea.vmem [#allocation2], 16
    %v66 = vld [vmem:[%s65] sm:$0xff]
    %v67 = vld [vmem:[%s65 + $0x8] sm:$0xff]
    %v68 = vlaneseq
    %v69 = vshrl.u32 %v68, 7
    %v70 = vsub.s32 1, %v69
    %v71 = vrot.slane %v41, %v70
    %v72 = vlaneseq
    %v73 = vshrl.u32 %v72, 7
    %v74 = vsub.s32 5, %v73
    %v75 = vrot.slane %v41, %v74
    %v78 = vlaneseq
    %v79 = vshrl.u32 %v78, 7
    %v80 = vsub.s32 1, %v79
    %v81 = vrot.slane %v71, %v80
    %v82 = vlaneseq
    %v83 = vshrl.u32 %v82, 7
    %v84 = vsub.s32 1, %v83
    %v85 = vrot.slane %v75, %v84
    %v86 = vmul.f32 %v66, %v81
    %v87 = vmul.f32 %v67, %v85
    %v88 = vadd.f32 %v63, %v86
    %v89 = vadd.f32 %v64, %v87
    %s90 = scalar_lea.vmem [#allocation2], 32
    %v91 = vld [vmem:[%s90] sm:$0xff]
    %v92 = vld [vmem:[%s90 + $0x8] sm:$0xff]
    %v93 = vlaneseq
    %v94 = vshrl.u32 %v93, 7
    %v95 = vsub.s32 2, %v94
    %v96 = vrot.slane %v41, %v95
    %v97 = vlaneseq
    %v98 = vshrl.u32 %v97, 7
    %v99 = vsub.s32 6, %v98
    %v100 = vrot.slane %v41, %v99
    %v103 = vlaneseq
    %v104 = vshrl.u32 %v103, 7
    %v105 = vsub.s32 2, %v104
    %v106 = vrot.slane %v96, %v105
    %v107 = vlaneseq
    %v108 = vshrl.u32 %v107, 7
    %v109 = vsub.s32 2, %v108
    %v110 = vrot.slane %v100, %v109
    %v111 = vmul.f32 %v91, %v106
    %v112 = vmul.f32 %v92, %v110
    %v113 = vadd.f32 %v88, %v111
    %v114 = vadd.f32 %v89, %v112
    %s115 = scalar_lea.vmem [#allocation2], 48
    %v116 = vld [vmem:[%s115] sm:$0xff]
    %v117 = vld [vmem:[%s115 + $0x8] sm:$0xff]
    %v118 = vlaneseq
    %v119 = vshrl.u32 %v118, 7
    %v120 = vsub.s32 3, %v119
    %v121 = vrot.slane %v41, %v120
    %v122 = vlaneseq
    %v123 = vshrl.u32 %v122, 7
    %v124 = vsub.s32 7, %v123
    %v125 = vrot.slane %v41, %v124
    %v128 = vlaneseq
    %v129 = vshrl.u32 %v128, 7
    %v130 = vsub.s32 3, %v129
    %v131 = vrot.slane %v121, %v130
    %v132 = vlaneseq
    %v133 = vshrl.u32 %v132, 7
    %v134 = vsub.s32 3, %v133
    %v135 = vrot.slane %v125, %v134
    %v136 = vmul.f32 %v116, %v131
    %v137 = vmul.f32 %v117, %v135
    %v138 = vadd.f32 %v113, %v136
    %v139 = vadd.f32 %v114, %v137
    %v140 = vld [vmem:[%s2] sm:$0x3]
    %v142 = vlaneseq
    %v143 = vshrl.u32 %v142, 7
    %v144 = vsub.s32 0, %v143
    %v145 = vrot.slane %v140, %v144
    %v146 = vlaneseq
    %v147 = vshrl.u32 %v146, 7
    %v148 = vsub.s32 1, %v147
    %v149 = vrot.slane %v140, %v148
    %v152 = vadd.f32 %v138, %v145
    %v153 = vadd.f32 %v139, %v149
    %154 = vst [vmem:[#allocation7] sm:$0xff] %v152
    %155 = vst [vmem:[#allocation7 + $0x8] sm:$0xff] %v153
    // Predicated region
    $region22: #{tpu_custom_call.1} parent=1 // pred_check
      _
    $region23: #{tpu_custom_call.1} parent=1 // pred_check_branch
      %157 = sbr.rel (0) target = $region25
    $region24: #{tpu_custom_call.1} parent=1 // pred_region
      %s159 = ssub.s32 256, 256
      %160 = vsyncadd [#allocation4], %s159
      %s162 = sshll.u32 [#allocation7], 4
      %s163 = int_to_ptr.vmem [resolvable:$true] %s162
      %165 = dma.vmem_to_hbm [thread:$0]  %s163, 256, %s3, [#allocation4]
    $region25: #{tpu_custom_call.1} parent=1 // pred_fallthru
      _
    // Predicated region
    $region26: #{tpu_custom_call.1} parent=1 // pred_check
      _
    $region27: #{tpu_custom_call.1} parent=1 // pred_check_branch
      %167 = sbr.rel (0) target = $region29
    $region28: #{tpu_custom_call.1} parent=1 // pred_region
      %168 = dma.done [#allocation4], 256
    $region29: #{tpu_custom_call.1} parent=1 // pred_fallthru
      _
    %169 = vsyncpa [#allocation3], 1
    %170 = vsyncpa [#allocation6], 1
    %171 = vsyncpa [#allocation4], 1

</llo_original>
